<compile_context>
chip_gen: v6e
topology: v6e:2x2x1
jax: 0.10.0
libtpu: 0.0.40
codegen_flags: <defaults>
</compile_context>

<pallas_src>
import functools

import jax
import jax.numpy as jnp
from jax import lax
from jax.experimental import pallas as pl
from jax.experimental.pallas import tpu as pltpu


def _esympnet_kernel(x_ref, wz_ref, k1a_ref, out_ref, *, layers, d, dc, has_h):
    """Feature-major tile: x_ref is (feat, TN) with rows
       [0:d)=p, [d:2d)=q, [2d:2d+dc)=c, [2d+dc]=h (optional).

    All work is lane-independent, so a ragged last tile (N % TN != 0) is safe:
    the out-of-bounds lanes are uninitialized VMEM and may produce NaN/Inf
    through sigmoid, but they are never read across lanes and are masked on
    output writeback.  Do NOT add cross-lane reductions here without masking.
    """
    f32 = jnp.float32
    p = x_ref[0:d, :].astype(f32)                        # (d, TN)
    q = x_ref[d:2 * d, :].astype(f32)                    # (d, TN)
    ones = jnp.ones_like(p[:1, :])                       # (1, TN), hoisted
    if dc > 0:
        c1 = jnp.concatenate(                            # (dc+1, TN) = [c ; 1]
            [x_ref[2 * d:2 * d + dc, :].astype(f32), ones], axis=0)
    else:
        c1 = ones                                        # dim == latent_dim
    if has_h:
        h = x_ref[2 * d + dc:2 * d + dc + 1, :].astype(f32)   # (1, TN)

    # (A, K) x (K, TN) -> (A, TN), batch lane-dense on the RHS.
    contract = lambda w, v: lax.dot_general(
        w, v, (((1,), (0,)), ((), ())), preferred_element_type=f32)

    # layers is small (<= 8 in practice): static unroll is the right call.
    for i in range(layers):
        src = q if i % 2 == 0 else p          # 'up' layers read q, 'low' read p
        # z = K1^T @ src + K2^T @ c + b, fused into a single MXU contraction
        # against Wz[i] = [K1^T | K2^T | b] and zin = [src ; c ; 1].
        zin = jnp.concatenate([src, c1], axis=0)                 # (d+dc+1, TN)
        z = contract(wz_ref[i], zin)                             # (W, TN)
        # a is folded into K1 (K1a = K1 * a) in the wrapper.
        g = contract(k1a_ref[i], jax.nn.sigmoid(z))              # (d, TN)
        if has_h:
            g = g * h                         # sublane-broadcast of (1, TN)
        if i % 2 == 0:
            p = p + g
        else:
            q = q + g

    # Single full-block store for the (2d, TN) output tile.
    out_ref[...] = jnp.concatenate([p, q], axis=0).astype(out_ref.dtype)


def _choose_tile(n, tile_n):
    """Batch (lane) tile size.

    Full batch for tiny n; otherwise a multiple of 128 chosen so the grid has
    at least 2 steps (v7x megacore needs >1 grid step to use both cores)."""
    if n <= 256:
        return n                                      # single full-extent tile
    cap = max(128, (tile_n // 128) * 128)
    half = max(128, (pl.cdiv(n, 2) // 128) * 128)     # guarantees >= 2 steps
    return min(cap, half)


def esympnet_forward(pqch, params, *, dim, latent_dim, layers, width,
                     tile_n=8192):
    """pqch: [num, dim] or [num, dim + 1] (last column = step h).
    params: stacked per-layer tensors K1 [L,d,W], K2 [L,dc,W], a [L,W], b [L,W].
    Returns [num, dim]."""
    d = latent_dim // 2
    dc = dim - latent_dim
    feat = pqch.shape[-1]
    if feat == dim + 1:
        has_h = True
    elif feat == dim:
        has_h = False
    else:
        raise ValueError("bad input width")

    n = pqch.shape[0]
    # Single feature-major stream into the kernel (one transpose in the
    # wrapper; batch rides the 128-wide lane axis inside the kernel).
    xT = pqch.T                                        # (feat, n)

    tn = _choose_tile(n, tile_n)
    grid = (pl.cdiv(n, tn),)

    f32 = jnp.float32
    K1 = params["K1"].astype(f32)                      # (L, d,  W)
    K2 = params["K2"].astype(f32)                      # (L, dc, W)
    a = params["a"].astype(f32)                        # (L, W)
    b = params["b"].astype(f32)                        # (L, W)
    # Fused z weight [K1^T | K2^T | b] so z = Wz @ [src ; c ; 1].
    Wz = jnp.concatenate([jnp.swapaxes(K1, 1, 2),
                          jnp.swapaxes(K2, 1, 2),
                          b[:, :, None]], axis=2)      # (L, W, d+dc+1)
    # a folded into K1: gradH = K1a @ sigmoid(z).
    K1a = K1 * a[:, None, :]                           # (L, d, W)

    kernel = functools.partial(_esympnet_kernel,
                               layers=layers, d=d, dc=dc, has_h=has_h)

    full = lambda shape: pl.BlockSpec(shape, lambda i: (0,) * len(shape))

    pq_T = pl.pallas_call(
        kernel,
        out_shape=jax.ShapeDtypeStruct((2 * d, n), pqch.dtype),
        grid_spec=pltpu.PrefetchScalarGridSpec(
            num_scalar_prefetch=0,
            grid=grid,
            in_specs=[
                pl.BlockSpec((feat, tn), lambda i: (0, i)),   # pqch^T tile
                full((layers, width, d + dc + 1)),            # Wz (fused z)
                full((layers, d, width)),                     # K1a (a folded)
            ],
            out_specs=pl.BlockSpec((2 * d, tn), lambda i: (0, i)),
        ),
        compiler_params=pltpu.CompilerParams(
            dimension_semantics=("parallel",),
            vmem_limit_bytes=32 * 1024 * 1024),
    )(xT, Wz, K1a)

    # `c` is a pure passthrough: reattach it outside the kernel.
    c = pqch[..., 2 * d:2 * d + dc]
    return jnp.concatenate([pq_T.T, c], axis=-1)


def init_params(key, *, dim, latent_dim, layers, width, dtype=jnp.float32):
    d = latent_dim // 2
    dc = dim - latent_dim
    k1, k2, ka = jax.random.split(key, 3)
    return {
        "K1": 0.01 * jax.random.normal(k1, (layers, d, width), dtype),
        "K2": 0.01 * jax.random.normal(k2, (layers, dc, width), dtype),
        "a": 0.01 * jax.random.normal(ka, (layers, width), dtype),
        "b": jnp.zeros((layers, width), dtype),
    }


def esympnet_reference(pqch, params, *, dim, latent_dim, layers):
    """Pure-JAX reference mirroring the PyTorch forward, for validation."""
    d = latent_dim // 2
    if pqch.shape[-1] == dim + 1:
        p, q, c, h = (pqch[..., :d], pqch[..., d:2 * d],
                      pqch[..., 2 * d:-1], pqch[..., -1:])
    else:
        p, q, c, h = (pqch[..., :d], pqch[..., d:2 * d],
                      pqch[..., 2 * d:], jnp.ones_like(pqch[..., -1:]))
    for i in range(layers):
        K1, K2 = params["K1"][i], params["K2"][i]
        a, b = params["a"][i], params["b"][i]
        if i % 2 == 0:
            gradH = (jax.nn.sigmoid(q @ K1 + c @ K2 + b) * a) @ K1.T
            p = p + gradH * h
        else:
            gradH = (jax.nn.sigmoid(p @ K1 + c @ K2 + b) * a) @ K1.T
            q = gradH * h + q
    return jnp.concatenate([p, q, c], axis=-1)


def _check(out, ref, shape):
    assert out.shape == shape
    assert jnp.allclose(out, ref, atol=1e-5, rtol=1e-5)


if __name__ == "__main__":
    # Small config consistent with the module: dim=8, latent_dim=4 (d=2, dc=4),
    # layers=3, width=32.
    dim, latent_dim, layers, width = 8, 4, 3, 32
    num = 384

    key = jax.random.PRNGKey(0)
    k_in, k_par, k_r = jax.random.split(key, 3)
    params = init_params(k_par, dim=dim, latent_dim=latent_dim,
                         layers=layers, width=width)

    # Case 1: input [num, dim + 1] (last column is the step size h);
    # tile_n=128 forces a 3-step grid.
    pqch = jax.random.normal(k_in, (num, dim + 1), jnp.float32)
    out = esympnet_forward(pqch, params, dim=dim, latent_dim=latent_dim,
                           layers=layers, width=width, tile_n=128)
    out = jax.block_until_ready(out)
    ref = esympnet_reference(pqch, params, dim=dim, latent_dim=latent_dim,
                             layers=layers)
    _check(out, ref, (num, dim))

    # Case 2: input [num, dim] (h implicitly 1), default tile_n.
    x2 = pqch[:, :dim]
    out2 = esympnet_forward(x2, params, dim=dim, latent_dim=latent_dim,
                            layers=layers, width=width)
    out2 = jax.block_until_ready(out2)
    ref2 = esympnet_reference(x2, params, dim=dim, latent_dim=latent_dim,
                              layers=layers)
    _check(out2, ref2, (num, dim))

    # Case 3: ragged last tile (num not a multiple of the 128-lane tile).
    num3 = 1000
    pqch3 = jax.random.normal(k_r, (num3, dim + 1), jnp.float32)
    out3 = esympnet_forward(pqch3, params, dim=dim, latent_dim=latent_dim,
                            layers=layers, width=width)
    out3 = jax.block_until_ready(out3)
    ref3 = esympnet_reference(pqch3, params, dim=dim, latent_dim=latent_dim,
                              layers=layers)
    _check(out3, ref3, (num3, dim))

    # Case 4: dc == 0 edge case (dim == latent_dim).
    dim4, latent4 = 4, 4
    params4 = init_params(k_par, dim=dim4, latent_dim=latent4,
                          layers=layers, width=width)
    pqch4 = jax.random.normal(k_in, (300, dim4 + 1), jnp.float32)
    out4 = esympnet_forward(pqch4, params4, dim=dim4, latent_dim=latent4,
                            layers=layers, width=width)
    out4 = jax.block_until_ready(out4)
    ref4 = esympnet_reference(pqch4, params4, dim=dim4, latent_dim=latent4,
                              layers=layers)
    _check(out4, ref4, (300, dim4))

    print("KERNEL_OK")
</pallas_src>

<mosaic_0001>
module attributes {stable_mosaic.version = 11 : i64} {
  func.func @_esympnet_kernel(%arg0: i32, %arg1: memref<9x128xf32, #tpu.memory_space<vmem>>, %arg2: memref<3x32x7xf32, #tpu.memory_space<vmem>>, %arg3: memref<3x2x32xf32, #tpu.memory_space<vmem>>, %arg4: memref<4x128xf32, #tpu.memory_space<vmem>>) attributes {dimension_semantics = [#tpu.dimension_semantics<parallel>], iteration_bounds = array<i64: 3>, scalar_prefetch = 0 : i64, scratch_operands = 0 : i64, tpu.core_type = #tpu.core_type<tc>, window_params = [{transform_indices = @transform_0, window_bounds = array<i64: 9, 128>}, {pipeline_mode = #tpu.pipeline_mode<synchronous>, transform_indices = @transform_1, window_bounds = array<i64: 3, 32, 7>}, {pipeline_mode = #tpu.pipeline_mode<synchronous>, transform_indices = @transform_2, window_bounds = array<i64: 3, 2, 32>}, {transform_indices = @transform_3, window_bounds = array<i64: 4, 128>}]} {
    %c0 = arith.constant 0 : index
    %c0_0 = arith.constant 0 : index
    %0 = vector.load %arg1[%c0, %c0_0] : memref<9x128xf32, #tpu.memory_space<vmem>>, vector<2x128xf32>
    %c2 = arith.constant 2 : index
    %c0_1 = arith.constant 0 : index
    %1 = vector.load %arg1[%c2, %c0_1] : memref<9x128xf32, #tpu.memory_space<vmem>>, vector<2x128xf32>
    %cst = arith.constant 1.000000e+00 : f32
    %2 = vector.broadcast %cst : f32 to vector<1x128xf32>
    %c4 = arith.constant 4 : index
    %c0_2 = arith.constant 0 : index
    %3 = vector.load %arg1[%c4, %c0_2] : memref<9x128xf32, #tpu.memory_space<vmem>>, vector<4x128xf32>
    %4 = tpu.concatenate %3, %2 in 0 : vector<4x128xf32>, vector<1x128xf32> -> vector<5x128xf32>
    %c8 = arith.constant 8 : index
    %c0_3 = arith.constant 0 : index
    %5 = vector.load %arg1[%c8, %c0_3] : memref<9x128xf32, #tpu.memory_space<vmem>>, vector<1x128xf32>
    %6 = tpu.concatenate %1, %4 in 0 : vector<2x128xf32>, vector<5x128xf32> -> vector<7x128xf32>
    %c0_4 = arith.constant 0 : index
    %c0_5 = arith.constant 0 : index
    %c0_6 = arith.constant 0 : index
    %7 = vector.load %arg2[%c0_4, %c0_5, %c0_6] : memref<3x32x7xf32, #tpu.memory_space<vmem>>, vector<1x32x7xf32>
    %8 = vector.shape_cast %7 : vector<1x32x7xf32> to vector<32x7xf32>
    %cst_7 = arith.constant dense<0.000000e+00> : vector<32x128xf32>
    %9 = tpu.matmul %8, %6, %cst_7 {dimension_numbers = #tpu.dot_dimension_numbers<[1], [0], [0], [1], [0, 0, 1, 1], [], []>} : vector<32x7xf32>, vector<7x128xf32>, vector<32x128xf32> -> vector<32x128xf32>
    %c0_8 = arith.constant 0 : index
    %c0_9 = arith.constant 0 : index
    %c0_10 = arith.constant 0 : index
    %10 = vector.load %arg3[%c0_8, %c0_9, %c0_10] : memref<3x2x32xf32, #tpu.memory_space<vmem>>, vector<1x2x32xf32>
    %11 = vector.shape_cast %10 : vector<1x2x32xf32> to vector<2x32xf32>
    %12 = arith.negf %9 : vector<32x128xf32>
    %13 = math.exp %12 : vector<32x128xf32>
    %cst_11 = arith.constant 1.000000e+00 : f32
    %14 = vector.broadcast %cst_11 : f32 to vector<32x128xf32>
    %15 = arith.addf %14, %13 : vector<32x128xf32>
    %16 = arith.divf %14, %15 : vector<32x128xf32>
    %cst_12 = arith.constant dense<0.000000e+00> : vector<2x128xf32>
    %17 = tpu.matmul %11, %16, %cst_12 {dimension_numbers = #tpu.dot_dimension_numbers<[1], [0], [0], [1], [0, 0, 1, 1], [], []>} : vector<2x32xf32>, vector<32x128xf32>, vector<2x128xf32> -> vector<2x128xf32>
    %18 = vector.broadcast %5 : vector<1x128xf32> to vector<2x128xf32>
    %19 = arith.mulf %17, %18 : vector<2x128xf32>
    %20 = arith.addf %0, %19 : vector<2x128xf32>
    %21 = tpu.concatenate %20, %4 in 0 : vector<2x128xf32>, vector<5x128xf32> -> vector<7x128xf32>
    %c1 = arith.constant 1 : index
    %c0_13 = arith.constant 0 : index
    %c0_14 = arith.constant 0 : index
    %22 = vector.load %arg2[%c1, %c0_13, %c0_14] : memref<3x32x7xf32, #tpu.memory_space<vmem>>, vector<1x32x7xf32>
    %23 = vector.shape_cast %22 : vector<1x32x7xf32> to vector<32x7xf32>
    %cst_15 = arith.constant dense<0.000000e+00> : vector<32x128xf32>
    %24 = tpu.matmul %23, %21, %cst_15 {dimension_numbers = #tpu.dot_dimension_numbers<[1], [0], [0], [1], [0, 0, 1, 1], [], []>} : vector<32x7xf32>, vector<7x128xf32>, vector<32x128xf32> -> vector<32x128xf32>
    %c1_16 = arith.constant 1 : index
    %c0_17 = arith.constant 0 : index
    %c0_18 = arith.constant 0 : index
    %25 = vector.load %arg3[%c1_16, %c0_17, %c0_18] : memref<3x2x32xf32, #tpu.memory_space<vmem>>, vector<1x2x32xf32>
    %26 = vector.shape_cast %25 : vector<1x2x32xf32> to vector<2x32xf32>
    %27 = arith.negf %24 : vector<32x128xf32>
    %28 = math.exp %27 : vector<32x128xf32>
    %cst_19 = arith.constant 1.000000e+00 : f32
    %29 = vector.broadcast %cst_19 : f32 to vector<32x128xf32>
    %30 = arith.addf %29, %28 : vector<32x128xf32>
    %31 = arith.divf %29, %30 : vector<32x128xf32>
    %cst_20 = arith.constant dense<0.000000e+00> : vector<2x128xf32>
    %32 = tpu.matmul %26, %31, %cst_20 {dimension_numbers = #tpu.dot_dimension_numbers<[1], [0], [0], [1], [0, 0, 1, 1], [], []>} : vector<2x32xf32>, vector<32x128xf32>, vector<2x128xf32> -> vector<2x128xf32>
    %33 = vector.broadcast %5 : vector<1x128xf32> to vector<2x128xf32>
    %34 = arith.mulf %32, %33 : vector<2x128xf32>
    %35 = arith.addf %1, %34 : vector<2x128xf32>
    %36 = tpu.concatenate %35, %4 in 0 : vector<2x128xf32>, vector<5x128xf32> -> vector<7x128xf32>
    %c2_21 = arith.constant 2 : index
    %c0_22 = arith.constant 0 : index
    %c0_23 = arith.constant 0 : index
    %37 = vector.load %arg2[%c2_21, %c0_22, %c0_23] : memref<3x32x7xf32, #tpu.memory_space<vmem>>, vector<1x32x7xf32>
    %38 = vector.shape_cast %37 : vector<1x32x7xf32> to vector<32x7xf32>
    %cst_24 = arith.constant dense<0.000000e+00> : vector<32x128xf32>
    %39 = tpu.matmul %38, %36, %cst_24 {dimension_numbers = #tpu.dot_dimension_numbers<[1], [0], [0], [1], [0, 0, 1, 1], [], []>} : vector<32x7xf32>, vector<7x128xf32>, vector<32x128xf32> -> vector<32x128xf32>
    %c2_25 = arith.constant 2 : index
    %c0_26 = arith.constant 0 : index
    %c0_27 = arith.constant 0 : index
    %40 = vector.load %arg3[%c2_25, %c0_26, %c0_27] : memref<3x2x32xf32, #tpu.memory_space<vmem>>, vector<1x2x32xf32>
    %41 = vector.shape_cast %40 : vector<1x2x32xf32> to vector<2x32xf32>
    %42 = arith.negf %39 : vector<32x128xf32>
    %43 = math.exp %42 : vector<32x128xf32>
    %cst_28 = arith.constant 1.000000e+00 : f32
    %44 = vector.broadcast %cst_28 : f32 to vector<32x128xf32>
    %45 = arith.addf %44, %43 : vector<32x128xf32>
    %46 = arith.divf %44, %45 : vector<32x128xf32>
    %cst_29 = arith.constant dense<0.000000e+00> : vector<2x128xf32>
    %47 = tpu.matmul %41, %46, %cst_29 {dimension_numbers = #tpu.dot_dimension_numbers<[1], [0], [0], [1], [0, 0, 1, 1], [], []>} : vector<2x32xf32>, vector<32x128xf32>, vector<2x128xf32> -> vector<2x128xf32>
    %48 = vector.broadcast %5 : vector<1x128xf32> to vector<2x128xf32>
    %49 = arith.mulf %47, %48 : vector<2x128xf32>
    %50 = arith.addf %20, %49 : vector<2x128xf32>
    %51 = tpu.concatenate %50, %35 in 0 : vector<2x128xf32>, vector<2x128xf32> -> vector<4x128xf32>
    %c0_30 = arith.constant 0 : index
    %c0_31 = arith.constant 0 : index
    %52 = vector.load %arg4[%c0_30, %c0_31] : memref<4x128xf32, #tpu.memory_space<vmem>>, vector<4x128xf32>
    tpu.vector_store %arg4[%c0_30, %c0_31], %51 {strides = array<i32>} : memref<4x128xf32, #tpu.memory_space<vmem>>, vector<4x128xf32>,
    return
  }
  func.func @transform_0(%arg0: i32) -> (i32, i32) {
    %c0_i32 = arith.constant 0 : i32
    %c0_i32_0 = arith.constant 0 : i32
    return %c0_i32, %arg0 : i32, i32
  }
  func.func @transform_1(%arg0: i32) -> (i32, i32, i32) {
    %c0_i32 = arith.constant 0 : i32
    %c0_i32_0 = arith.constant 0 : i32
    %c0_i32_1 = arith.constant 0 : i32
    %c0_i32_2 = arith.constant 0 : i32
    return %c0_i32, %c0_i32_0, %c0_i32_1 : i32, i32, i32
  }
  func.func @transform_2(%arg0: i32) -> (i32, i32, i32) {
    %c0_i32 = arith.constant 0 : i32
    %c0_i32_0 = arith.constant 0 : i32
    %c0_i32_1 = arith.constant 0 : i32
    %c0_i32_2 = arith.constant 0 : i32
    return %c0_i32, %c0_i32_0, %c0_i32_1 : i32, i32, i32
  }
  func.func @transform_3(%arg0: i32) -> (i32, i32) {
    %c0_i32 = arith.constant 0 : i32
    %c0_i32_0 = arith.constant 0 : i32
    return %c0_i32, %arg0 : i32, i32
  }
}

</mosaic_0001>

<llo_original>
// kernel: tpu_custom_call.1
$region0: #{tpu_custom_call.1}
  #allocation0 [shape = 'u32[]', space=smem, size = 0x4, offset = 0x4, fixed_abs, tag = 'smem constant byte address 0x4 - core index']
  #allocation1 [shape = 'u32[144,128]{1,0:T(1,128)}', space=vmem, size = 0x12000, scoped, tag = 'internal scratch']
  %s0 = inlined_call_operand.vmem [shape: f32[9,384], index: 0, kind: input, shape index: {}]
  %s1 = inlined_call_operand.vmem [shape: f32[3,32,7], index: 1, kind: input, shape index: {}]
  %s2 = inlined_call_operand.vmem [shape: f32[3,2,32], index: 2, kind: input, shape index: {}]
  %s3 = inlined_call_operand.hbm [shape: f32[4,384], index: 3, kind: output, shape index: {}]
  %s4 = sld [smem:[#allocation0]]
  $region83: #{tpu_custom_call.1} parent=0
    _
  %s6 = ssub.s32 1, %s4
  %s7 = scalar_select 0, %s6, %s4
  $region1: #{tpu_custom_call.1} parent=0
    #allocation2 [shape = 'u8[16384]{0}', space=vmem, size = 0x4000, scoped, tag = 'input window, operand 0']
    #allocation3 [shape = 'u8[4096]{0}', space=vmem, size = 0x1000, scoped, tag = 'output window, operand 0']
    #allocation4 [shape = 's32[2]{0}', space=sflag, size = 0x8, scoped, tag = 'scoped memory for tpu_custom_call.1']
    %8 = vsyncpa [#allocation4], 0
    %s9 = scalar_lea.sflag [#allocation4], 1
    %10 = vsyncpa %s9, 0
    loop: start=0, step=1, limit=5
    $region2: #{tpu_custom_call.1} parent=1 // loop_pre_header
      _
    $region3: #{tpu_custom_call.1} parent=1 // loop_header
      %s12 = sphi 0, %s16
      %p13 = scmp.ge.s32.totalorder %s12, 5
      %s22 = sphi 0, %s24
      %s25 = sphi 0, %s22
      %s26 = sphi 0, %s25
      %s42 = sphi 0, %s26
      %s46 = sphi 0, %s46
      %s48 = sphi 0, %s46
      %s49 = sphi 0, %s48
      %s63 = sphi 0, %s49
      %s67 = sphi 0, %s67
      %s69 = sphi 0, %s67
      %s70 = sphi 0, %s69
      %s84 = sphi 0, %s70
      %s90 = sphi 0, %s92
      %s93 = sphi 0, %s90
      %s94 = sphi 0, %s93
      %s110 = sphi 0, %s94
    $region4: #{tpu_custom_call.1} parent=1 // loop_header_branch
      %15 = sbr.rel (%p13) target = $region8
    $region5: #{tpu_custom_call.1} parent=1 // loop_body
      %s17 = ssub.s32 %s12, 1
      %s18 = ssub.s32 %s12, 2
      %s19 = sadd.s32 %s12, 1
      %s20 = ssub.s32 %s12, %s19
      %p21 = scmp.eq.s32.totalorder %s20, 0
      %s23 = sadd.s32 %s22, 1
      %s24 = scalar_select %p21, %s22, %s23
      %p27 = pneg %p21
      %p28 = scmp.eq.s32.totalorder %s12, 2
      %p29 = por %p27, %p28
      %p30 = scmp.ne.s32.totalorder %s22, %s25
      %p31 = scmp.eq.s32.totalorder %s12, 0
      %p32 = por %p30, %p31
      %p33 = scmp.ne.s32.totalorder %s22, %s25
      %p34 = scmp.eq.s32.totalorder %s17, 2
      %p35 = por %p33, %p34
      %p36 = scmp.ne.s32.totalorder %s25, %s26
      %p37 = scmp.eq.s32.totalorder %s17, 0
      %p38 = por %p36, %p37
      %p39 = scmp.ne.s32.totalorder %s25, %s26
      %p40 = scmp.eq.s32.totalorder %s18, 2
      %p41 = por %p39, %p40
      %p43 = scmp.ne.s32.totalorder %s26, %s42
      %p44 = scmp.eq.s32.totalorder %s18, 0
      %p45 = por %p43, %p44
      %s47 = sadd.s32 %s46, 1
      %p50 = scmp.eq.s32.totalorder %s12, 2
      %p51 = scmp.ne.s32.totalorder %s46, %s48
      %p52 = scmp.eq.s32.totalorder %s12, 0
      %p53 = por %p51, %p52
      %p54 = scmp.ne.s32.totalorder %s46, %s48
      %p55 = scmp.eq.s32.totalorder %s17, 2
      %p56 = por %p54, %p55
      %p57 = scmp.ne.s32.totalorder %s48, %s49
      %p58 = scmp.eq.s32.totalorder %s17, 0
      %p59 = por %p57, %p58
      %p60 = scmp.ne.s32.totalorder %s48, %s49
      %p61 = scmp.eq.s32.totalorder %s18, 2
      %p62 = por %p60, %p61
      %p64 = scmp.ne.s32.totalorder %s49, %s63
      %p65 = scmp.eq.s32.totalorder %s18, 0
      %p66 = por %p64, %p65
      %s68 = sadd.s32 %s67, 1
      %p71 = scmp.eq.s32.totalorder %s12, 2
      %p72 = scmp.ne.s32.totalorder %s67, %s69
      %p73 = scmp.eq.s32.totalorder %s12, 0
      %p74 = por %p72, %p73
      %p75 = scmp.ne.s32.totalorder %s67, %s69
      %p76 = scmp.eq.s32.totalorder %s17, 2
      %p77 = por %p75, %p76
      %p78 = scmp.ne.s32.totalorder %s69, %s70
      %p79 = scmp.eq.s32.totalorder %s17, 0
      %p80 = por %p78, %p79
      %p81 = scmp.ne.s32.totalorder %s69, %s70
      %p82 = scmp.eq.s32.totalorder %s18, 2
      %p83 = por %p81, %p82
      %p85 = scmp.ne.s32.totalorder %s70, %s84
      %p86 = scmp.eq.s32.totalorder %s18, 0
      %p87 = por %p85, %p86
      %s88 = ssub.s32 %s12, %s19
      %p89 = scmp.eq.s32.totalorder %s88, 0
      %s91 = sadd.s32 %s90, 1
      %s92 = scalar_select %p89, %s90, %s91
      %p95 = pneg %p89
      %p96 = scmp.eq.s32.totalorder %s12, 2
      %p97 = por %p95, %p96
      %p98 = scmp.ne.s32.totalorder %s90, %s93
      %p99 = scmp.eq.s32.totalorder %s12, 0
      %p100 = por %p98, %p99
      %p101 = scmp.ne.s32.totalorder %s90, %s93
      %p102 = scmp.eq.s32.totalorder %s17, 2
      %p103 = por %p101, %p102
      %p104 = scmp.ne.s32.totalorder %s93, %s94
      %p105 = scmp.eq.s32.totalorder %s17, 0
      %p106 = por %p104, %p105
      %p107 = scmp.ne.s32.totalorder %s93, %s94
      %p108 = scmp.eq.s32.totalorder %s18, 2
      %p109 = por %p107, %p108
      %p111 = scmp.ne.s32.totalorder %s94, %s110
      %p112 = scmp.eq.s32.totalorder %s18, 0
      %p113 = por %p111, %p112
      %p114 = scmp.le.s32.totalorder 1, %s12
      %p115 = scmp.lt.s32.totalorder %s12, 4
      %p116 = pnand %p114, %p115
      %p117 = pneg %p116
      // Predicated region
      $region9: #{tpu_custom_call.1} parent=5 // pred_check
        _
      $region10: #{tpu_custom_call.1} parent=5 // pred_check_branch
        %119 = sbr.rel (%p116) target = $region12
      $region11: #{tpu_custom_call.1} parent=5 // pred_region
        %s120 = ssub.s32 %s12, 1
        // Predicated region
        $region13: #{tpu_custom_call.1} parent=11 // pred_check
          %p121 = pneg %p59
        $region14: #{tpu_custom_call.1} parent=11 // pred_check_branch
          %123 = sbr.rel (%p121) target = $region16
        $region15: #{tpu_custom_call.1} parent=11 // pred_region
          _
        $region16: #{tpu_custom_call.1} parent=11 // pred_fallthru
          _
        // Predicated region
        $region17: #{tpu_custom_call.1} parent=11 // pred_check
          %p124 = pneg %p80
        $region18: #{tpu_custom_call.1} parent=11 // pred_check_branch
          %126 = sbr.rel (%p124) target = $region20
        $region19: #{tpu_custom_call.1} parent=11 // pred_region
          _
        $region20: #{tpu_custom_call.1} parent=11 // pred_fallthru
          _
      $region12: #{tpu_custom_call.1} parent=5 // pred_fallthru
        _
      %p127 = scmp.lt.s32.totalorder %s12, 3
      // Predicated region
      $region21: #{tpu_custom_call.1} parent=5 // pred_check
        %p128 = pneg %p127
      $region22: #{tpu_custom_call.1} parent=5 // pred_check_branch
        %130 = sbr.rel (%p128) target = $region24
      $region23: #{tpu_custom_call.1} parent=5 // pred_region
        // Predicated region
        $region25: #{tpu_custom_call.1} parent=23 // pred_check
          %p131 = pneg %p32
        $region26: #{tpu_custom_call.1} parent=23 // pred_check_branch
          %133 = sbr.rel (%p131) target = $region28
        $region27: #{tpu_custom_call.1} parent=23 // pred_region
          %s134 = sand.u32 %s22, 1
          %s135 = sand.u32 %s22, 1
          %s136 = smul.addr %s135, 16
          %s137 = scalar_lea.vmem [#allocation2], %s136
          %s138 = smul.addr %s12, 8
          %s139 = scalar_lea.vmem %s0, %s138
          // Predicated region
          $region29: #{tpu_custom_call.1} parent=27 // pred_check
            _
          $region30: #{tpu_custom_call.1} parent=27 // pred_check_branch
            %141 = sbr.rel (0) target = $region32
          $region31: #{tpu_custom_call.1} parent=27 // pred_region
            // Predicated region
            $region33: #{tpu_custom_call.1} parent=31 // pred_check
              _
            $region34: #{tpu_custom_call.1} parent=31 // pred_check_branch
              %143 = sbr.rel (0) target = $region36
            $region35: #{tpu_custom_call.1} parent=31 // pred_region
              // Predicated region
              $region48: #{tpu_custom_call.1} parent=35 // pred_check
                _
              $region49: #{tpu_custom_call.1} parent=35 // pred_check_branch
                %161 = sbr.rel (0) target = $region51
              $region50: #{tpu_custom_call.1} parent=35 // pred_region
                loop: start=0, step=1, limit=1
                $region52: #{tpu_custom_call.1} parent=50 // loop_pre_header
                  _
                $region53: #{tpu_custom_call.1} parent=50 // loop_header
                  %s163 = sphi 0, %s167
                  %p164 = scmp.ge.s32.totalorder %s163, 1
                  %s168 = sphi %s139, %s139
                  %s169 = sphi %s137, %s137
                $region54: #{tpu_custom_call.1} parent=50 // loop_header_branch
                  %166 = sbr.rel (%p164) target = $region58
                $region55: #{tpu_custom_call.1} parent=50 // loop_body
                  %v170 = vld [vmem:[%s168] sm:$0xff]
                  %171 = vst [vmem:[%s169] sm:$0xff] %v170
                  %v172 = vld [vmem:[%s168 + $0x18] sm:$0xff]
                  %173 = vst [vmem:[%s169 + $0x8] sm:$0xff] %v172
                $region56: #{tpu_custom_call.1} parent=50 // loop_footer
                  %s167 = sadd.s32 1, %s163
                $region57: #{tpu_custom_call.1} parent=50 // loop_footer_branch
                  %162 = sbr.rel target = $region53
                $region58: #{tpu_custom_call.1} parent=50 // loop_exit
                  _
              $region51: #{tpu_custom_call.1} parent=35 // pred_fallthru
                _
              // Predicated region
              $region59: #{tpu_custom_call.1} parent=35 // pred_check
                _
              $region60: #{tpu_custom_call.1} parent=35 // pred_check_branch
                %175 = sbr.rel target = $region62
              $region61: #{tpu_custom_call.1} parent=35 // pred_region
                _
              $region62: #{tpu_custom_call.1} parent=35 // pred_fallthru
                _
            $region36: #{tpu_custom_call.1} parent=31 // pred_fallthru
              _
            // Predicated region
            $region37: #{tpu_custom_call.1} parent=31 // pred_check
              _
            $region38: #{tpu_custom_call.1} parent=31 // pred_check_branch
              %145 = sbr.rel target = $region40
            $region39: #{tpu_custom_call.1} parent=31 // pred_region
              %s147 = ssub.s32 256, 1
              loop: start=0, step=1, limit=1
              $region41: #{tpu_custom_call.1} parent=39 // loop_pre_header
                _
              $region42: #{tpu_custom_call.1} parent=39 // loop_header
                %s149 = sphi 0, %s153
                %p150 = scmp.ge.s32.totalorder %s149, 1
                %s154 = sphi %s139, %s139
                %s155 = sphi %s137, %s137
              $region43: #{tpu_custom_call.1} parent=39 // loop_header_branch
                %152 = sbr.rel (%p150) target = $region47
              $region44: #{tpu_custom_call.1} parent=39 // loop_body
                %v156 = vld [vmem:[%s154] sm:%s147]
                %157 = vst [vmem:[%s155] sm:%s147] %v156
                %v158 = vld [vmem:[%s154 + $0x18] sm:%s147]
                %159 = vst [vmem:[%s155 + $0x8] sm:%s147] %v158
              $region45: #{tpu_custom_call.1} parent=39 // loop_footer
                %s153 = sadd.s32 1, %s149
              $region46: #{tpu_custom_call.1} parent=39 // loop_footer_branch
                %148 = sbr.rel target = $region42
              $region47: #{tpu_custom_call.1} parent=39 // loop_exit
                _
            $region40: #{tpu_custom_call.1} parent=31 // pred_fallthru
              _
          $region32: #{tpu_custom_call.1} parent=27 // pred_fallthru
            _
          %176 = vnop
        $region28: #{tpu_custom_call.1} parent=23 // pred_fallthru
          _
      $region24: #{tpu_custom_call.1} parent=5 // pred_fallthru
        _
      %p177 = scmp.le.s32.totalorder 1, %s12
      %p178 = scmp.lt.s32.totalorder %s12, 4
      %p179 = pnand %p177, %p178
      %p180 = pneg %p179
      // Predicated region
      $region63: #{tpu_custom_call.1} parent=5 // pred_check
        _
      $region64: #{tpu_custom_call.1} parent=5 // pred_check_branch
        %182 = sbr.rel (%p179) target = $region66
      $region65: #{tpu_custom_call.1} parent=5 // pred_region
        %s183 = ssub.s32 %s12, 1
        %s184 = sand.u32 %s25, 1
        %s185 = sand.u32 %s25, 1
        %s186 = smul.addr %s185, 16
        %s187 = scalar_lea.vmem [#allocation2], %s186
        // Predicated region
        $region67: #{tpu_custom_call.1} parent=65 // pred_check
          %p188 = pneg %p38
        $region68: #{tpu_custom_call.1} parent=65 // pred_check_branch
          %190 = sbr.rel (%p188) target = $region70
        $region69: #{tpu_custom_call.1} parent=65 // pred_region
          _
        $region70: #{tpu_custom_call.1} parent=65 // pred_fallthru
          _
        %s191 = sand.u32 %s25, 1
        %s192 = sand.u32 %s25, 1
        %s193 = smul.addr %s192, 16
        %s194 = scalar_lea.vmem [#allocation2], %s193
        %p195 = pneg %p38
        %p196 = pneg %p35
        %p197 = pneg %p59
        %p198 = pneg %p56
        %p199 = pneg %p80
        %p200 = pneg %p77
        %p201 = pneg %p106
        %p202 = pneg %p103
        %s203 = sand.u32 %s93, 1
        %s204 = scalar_lea.sflag [#allocation4], %s203
        %s205 = sand.u32 %s93, 1
        %s206 = smul.addr %s205, 4
        %s207 = scalar_lea.vmem [#allocation3], %s206
        %v208 = vld [vmem:[%s187] sm:$0x3]
        %v209 = vld [vmem:[%s187 + $0x2] sm:$0x3]
        %v210 = vld [vmem:[%s187 + $0x4] sm:$0xf]
        %vm211 = vcmask 1043456
        %v212 = vsel %vm211, %v210, 1.0
        %v213 = vld [vmem:[%s187 + $0x8] sm:$0x1]
        %v215 = vrot.slane %v212, 6
        %vm217 = vcmask 1041408
        %v218 = vsel %vm217, %v209, %v215
        %v219 = vld [vmem:[%s1] sm:$0xff]
        %v220 = vld [vmem:[%s1 + $0x8] sm:$0xff]
        %v221 = vld [vmem:[%s1 + $0x10] sm:$0xff]
        %v222 = vld [vmem:[%s1 + $0x18] sm:$0xff]
        %vm223 = vcmask 56320
        %v225 = vsel %vm223, %v219, 0
        %v228 = vsel %vm223, %v220, 0
        %v231 = vsel %vm223, %v221, 0
        %v234 = vsel %vm223, %v222, 0
        %vm236 = vcmask 1046528
        %v238 = vsel %vm236, %v218, 0
        %240 = vmatprep.subr.mxu0 0.0
        %241 = vmatpush1.msra.mxu0 0.0
        %242 = vmatprep.subr.mxu0 0.0
        %243 = vmatpush1.msra.mxu0 0.0
        %244 = vmatprep.subr.mxu0 0.0
        %245 = vmatpush1.msra.mxu0 0.0
        %246 = vmatprep.subr.mxu0 0.0
        %247 = vmatpush1.msra.mxu0 0.0
        %248 = vmatprep.subr.mxu0 0.0
        %249 = vmatpush1.msra.mxu0 0.0
        %250 = vmatprep.subr.mxu0 0.0
        %251 = vmatpush1.msra.mxu0 0.0
        %252 = vmatprep.subr.mxu0 0.0
        %253 = vmatpush1.msra.mxu0 0.0
        %254 = vmatprep.subr.mxu0 0.0
        %255 = vmatpush1.msra.mxu0 0.0
        %256 = vmatprep.subr.mxu0 0.0
        %257 = vmatpush1.msra.mxu0 0.0
        %258 = vmatprep.subr.mxu0 0.0
        %259 = vmatpush1.msra.mxu0 0.0
        %260 = vmatprep.subr.mxu0 0.0
        %261 = vmatpush1.msra.mxu0 0.0
        %262 = vmatprep.subr.mxu0 0.0
        %263 = vmatpush1.msra.mxu0 0.0
        %264 = vmatprep.subr.mxu0 0.0
        %265 = vmatpush1.msra.mxu0 0.0
        %266 = vmatprep.subr.mxu0 0.0
        %267 = vmatpush1.msra.mxu0 0.0
        %268 = vmatprep.subr.mxu0 0.0
        %269 = vmatpush1.msra.mxu0 0.0
        %270 = vmatprep.subr.mxu0 0.0
        %271 = vmatpush1.msra.mxu0 %v238
        %272 = vmatprep.subr.mxu0 0.0
        %273 = vmatpush2.msra.mxu0 0.0
        %274 = vmatprep.subr.mxu0 0.0
        %275 = vmatpush2.msra.mxu0 0.0
        %276 = vmatprep.subr.mxu0 0.0
        %277 = vmatpush2.msra.mxu0 0.0
        %278 = vmatprep.subr.mxu0 0.0
        %279 = vmatpush2.msra.mxu0 0.0
        %280 = vmatprep.subr.mxu0 0.0
        %281 = vmatpush2.msra.mxu0 0.0
        %282 = vmatprep.subr.mxu0 0.0
        %283 = vmatpush2.msra.mxu0 0.0
        %284 = vmatprep.subr.mxu0 0.0
        %285 = vmatpush2.msra.mxu0 0.0
        %286 = vmatprep.subr.mxu0 0.0
        %287 = vmatpush2.msra.mxu0 0.0
        %288 = vmatprep.subr.mxu0 0.0
        %289 = vmatpush2.msra.mxu0 0.0
        %290 = vmatprep.subr.mxu0 0.0
        %291 = vmatpush2.msra.mxu0 0.0
        %292 = vmatprep.subr.mxu0 0.0
        %293 = vmatpush2.msra.mxu0 0.0
        %294 = vmatprep.subr.mxu0 0.0
        %295 = vmatpush2.msra.mxu0 0.0
        %296 = vmatprep.subr.mxu0 0.0
        %297 = vmatpush2.msra.mxu0 0.0
        %298 = vmatprep.subr.mxu0 0.0
        %299 = vmatpush2.msra.mxu0 0.0
        %300 = vmatprep.subr.mxu0 0.0
        %301 = vmatpush2.msra.mxu0 0.0
        %302 = vmatprep.subr.mxu0 0.0
        %303 = vmatpush2.msra.mxu0 0.0
        %304 = vmatprep.mubr.f32.mxu0 0.0
        %305 = vmatmul.mubr.f32.gmra.mxu0 %v225
        %v306 = vpop.f32.mrf.mxu0
        %v307 = vadd.f32 0.0, %v306
        %v308 = vpop.f32.mrf.mxu0
        %309 = vmatprep.mubr.f32.mxu0 0.0
        %310 = vmatmul.mubr.f32.gmra.mxu0 %v228
        %v311 = vpop.f32.mrf.mxu0
        %v312 = vadd.f32 0.0, %v311
        %v313 = vpop.f32.mrf.mxu0
        %314 = vmatprep.mubr.f32.mxu0 0.0
        %315 = vmatmul.mubr.f32.gmra.mxu0 %v231
        %v316 = vpop.f32.mrf.mxu0
        %v317 = vadd.f32 0.0, %v316
        %v318 = vpop.f32.mrf.mxu0
        %319 = vmatprep.mubr.f32.mxu0 0.0
        %320 = vmatmul.mubr.f32.gmra.mxu0 %v234
        %v321 = vpop.f32.mrf.mxu0
        %v322 = vadd.f32 0.0, %v321
        %v323 = vpop.f32.mrf.mxu0
        %324 = vdwg.mxu0
        %v325 = vld [vmem:[%s2] sm:$0x3]
        %v326 = vxor.u32 %v307, 2147483648
        %v327 = vxor.u32 %v312, 2147483648
        %v328 = vxor.u32 %v317, 2147483648
        %v329 = vxor.u32 %v322, 2147483648
        %v330 = vmul.f32 %v326, 1.442695
        %v331 = vpow.pop %v330
        %v332 = vmul.f32 %v327, 1.442695
        %v333 = vpow.pop %v332
        %v334 = vmul.f32 %v328, 1.442695
        %v335 = vpow.pop %v334
        %v336 = vmul.f32 %v329, 1.442695
        %v337 = vpow.pop %v336
        %v338 = vadd.f32 %v331, 1.0
        %v339 = vadd.f32 %v333, 1.0
        %v340 = vadd.f32 %v335, 1.0
        %v341 = vadd.f32 %v337, 1.0
        %v342 = vrcp.pop %v338
        %v343 = vmul.f32 1.0, %v342
        %v344 = vrcp.pop %v339
        %v345 = vmul.f32 1.0, %v344
        %v346 = vrcp.pop %v340
        %v347 = vmul.f32 1.0, %v346
        %v348 = vrcp.pop %v341
        %v349 = vmul.f32 1.0, %v348
        %vm350 = vcmask 261120
        %v352 = vsel %vm350, %v325, 0
        %354 = vmatprep.subr.mxu0 0.0
        %355 = vmatpush1.msra.mxu0 0.0
        %356 = vmatprep.subr.mxu0 0.0
        %357 = vmatpush1.msra.mxu0 0.0
        %358 = vmatprep.subr.mxu0 0.0
        %359 = vmatpush1.msra.mxu0 0.0
        %360 = vmatprep.subr.mxu0 0.0
        %361 = vmatpush1.msra.mxu0 0.0
        %362 = vmatprep.subr.mxu0 0.0
        %363 = vmatpush1.msra.mxu0 0.0
        %364 = vmatprep.subr.mxu0 0.0
        %365 = vmatpush1.msra.mxu0 0.0
        %366 = vmatprep.subr.mxu0 0.0
        %367 = vmatpush1.msra.mxu0 0.0
        %368 = vmatprep.subr.mxu0 0.0
        %369 = vmatpush1.msra.mxu0 0.0
        %370 = vmatprep.subr.mxu0 0.0
        %371 = vmatpush1.msra.mxu0 0.0
        %372 = vmatprep.subr.mxu0 0.0
        %373 = vmatpush1.msra.mxu0 0.0
        %374 = vmatprep.subr.mxu0 0.0
        %375 = vmatpush1.msra.mxu0 0.0
        %376 = vmatprep.subr.mxu0 0.0
        %377 = vmatpush1.msra.mxu0 0.0
        %378 = vmatprep.subr.mxu0 0.0
        %379 = vmatpush1.msra.mxu0 %v349
        %380 = vmatprep.subr.mxu0 0.0
        %381 = vmatpush1.msra.mxu0 %v347
        %382 = vmatprep.subr.mxu0 0.0
        %383 = vmatpush1.msra.mxu0 %v345
        %384 = vmatprep.subr.mxu0 0.0
        %385 = vmatpush1.msra.mxu0 %v343
        %386 = vmatprep.subr.mxu0 0.0
        %387 = vmatpush2.msra.mxu0 0.0
        %388 = vmatprep.subr.mxu0 0.0
        %389 = vmatpush2.msra.mxu0 0.0
        %390 = vmatprep.subr.mxu0 0.0
        %391 = vmatpush2.msra.mxu0 0.0
        %392 = vmatprep.subr.mxu0 0.0
        %393 = vmatpush2.msra.mxu0 0.0
        %394 = vmatprep.subr.mxu0 0.0
        %395 = vmatpush2.msra.mxu0 0.0
        %396 = vmatprep.subr.mxu0 0.0
        %397 = vmatpush2.msra.mxu0 0.0
        %398 = vmatprep.subr.mxu0 0.0
        %399 = vmatpush2.msra.mxu0 0.0
        %400 = vmatprep.subr.mxu0 0.0
        %401 = vmatpush2.msra.mxu0 0.0
        %402 = vmatprep.subr.mxu0 0.0
        %403 = vmatpush2.msra.mxu0 0.0
        %404 = vmatprep.subr.mxu0 0.0
        %405 = vmatpush2.msra.mxu0 0.0
        %406 = vmatprep.subr.mxu0 0.0
        %407 = vmatpush2.msra.mxu0 0.0
        %408 = vmatprep.subr.mxu0 0.0
        %409 = vmatpush2.msra.mxu0 0.0
        %410 = vmatprep.subr.mxu0 0.0
        %411 = vmatpush2.msra.mxu0 0.0
        %412 = vmatprep.subr.mxu0 0.0
        %413 = vmatpush2.msra.mxu0 0.0
        %414 = vmatprep.subr.mxu0 0.0
        %415 = vmatpush2.msra.mxu0 0.0
        %416 = vmatprep.subr.mxu0 0.0
        %417 = vmatpush2.msra.mxu0 0.0
        %418 = vmatprep.mubr.f32.mxu0 0.0
        %419 = vmatmul.mubr.f32.gmra.mxu0 %v352
        %v420 = vpop.f32.mrf.mxu0
        %v421 = vadd.f32 0.0, %v420
        %v422 = vpop.f32.mrf.mxu0
        %423 = vdwg.mxu0
        %v424 = vlaneseq
        %v425 = vshrl.u32 %v424, 7
        %v426 = vsub.s32 0, %v425
        %v427 = vrot.slane %v213, %v426
        %v428 = vmul.f32 %v421, %v427
        %v429 = vadd.f32 %v208, %v428
        %v430 = vsel %vm217, %v429, %v215
        %s431 = scalar_lea.vmem %s1, 32
        %v432 = vld [vmem:[%s431] sm:$0xff]
        %v433 = vld [vmem:[%s431 + $0x8] sm:$0xff]
        %v434 = vld [vmem:[%s431 + $0x10] sm:$0xff]
        %v435 = vld [vmem:[%s431 + $0x18] sm:$0xff]
        %v437 = vsel %vm223, %v432, 0
        %v440 = vsel %vm223, %v433, 0
        %v443 = vsel %vm223, %v434, 0
        %v446 = vsel %vm223, %v435, 0
        %v449 = vsel %vm236, %v430, 0
        %451 = vmatprep.subr.mxu0 0.0
        %452 = vmatpush1.msra.mxu0 0.0
        %453 = vmatprep.subr.mxu0 0.0
        %454 = vmatpush1.msra.mxu0 0.0
        %455 = vmatprep.subr.mxu0 0.0
        %456 = vmatpush1.msra.mxu0 0.0
        %457 = vmatprep.subr.mxu0 0.0
        %458 = vmatpush1.msra.mxu0 0.0
        %459 = vmatprep.subr.mxu0 0.0
        %460 = vmatpush1.msra.mxu0 0.0
        %461 = vmatprep.subr.mxu0 0.0
        %462 = vmatpush1.msra.mxu0 0.0
        %463 = vmatprep.subr.mxu0 0.0
        %464 = vmatpush1.msra.mxu0 0.0
        %465 = vmatprep.subr.mxu0 0.0
        %466 = vmatpush1.msra.mxu0 0.0
        %467 = vmatprep.subr.mxu0 0.0
        %468 = vmatpush1.msra.mxu0 0.0
        %469 = vmatprep.subr.mxu0 0.0
        %470 = vmatpush1.msra.mxu0 0.0
        %471 = vmatprep.subr.mxu0 0.0
        %472 = vmatpush1.msra.mxu0 0.0
        %473 = vmatprep.subr.mxu0 0.0
        %474 = vmatpush1.msra.mxu0 0.0
        %475 = vmatprep.subr.mxu0 0.0
        %476 = vmatpush1.msra.mxu0 0.0
        %477 = vmatprep.subr.mxu0 0.0
        %478 = vmatpush1.msra.mxu0 0.0
        %479 = vmatprep.subr.mxu0 0.0
        %480 = vmatpush1.msra.mxu0 0.0
        %481 = vmatprep.subr.mxu0 0.0
        %482 = vmatpush1.msra.mxu0 %v449
        %483 = vmatprep.subr.mxu0 0.0
        %484 = vmatpush2.msra.mxu0 0.0
        %485 = vmatprep.subr.mxu0 0.0
        %486 = vmatpush2.msra.mxu0 0.0
        %487 = vmatprep.subr.mxu0 0.0
        %488 = vmatpush2.msra.mxu0 0.0
        %489 = vmatprep.subr.mxu0 0.0
        %490 = vmatpush2.msra.mxu0 0.0
        %491 = vmatprep.subr.mxu0 0.0
        %492 = vmatpush2.msra.mxu0 0.0
        %493 = vmatprep.subr.mxu0 0.0
        %494 = vmatpush2.msra.mxu0 0.0
        %495 = vmatprep.subr.mxu0 0.0
        %496 = vmatpush2.msra.mxu0 0.0
        %497 = vmatprep.subr.mxu0 0.0
        %498 = vmatpush2.msra.mxu0 0.0
        %499 = vmatprep.subr.mxu0 0.0
        %500 = vmatpush2.msra.mxu0 0.0
        %501 = vmatprep.subr.mxu0 0.0
        %502 = vmatpush2.msra.mxu0 0.0
        %503 = vmatprep.subr.mxu0 0.0
        %504 = vmatpush2.msra.mxu0 0.0
        %505 = vmatprep.subr.mxu0 0.0
        %506 = vmatpush2.msra.mxu0 0.0
        %507 = vmatprep.subr.mxu0 0.0
        %508 = vmatpush2.msra.mxu0 0.0
        %509 = vmatprep.subr.mxu0 0.0
        %510 = vmatpush2.msra.mxu0 0.0
        %511 = vmatprep.subr.mxu0 0.0
        %512 = vmatpush2.msra.mxu0 0.0
        %513 = vmatprep.subr.mxu0 0.0
        %514 = vmatpush2.msra.mxu0 0.0
        %515 = vmatprep.mubr.f32.mxu0 0.0
        %516 = vmatmul.mubr.f32.gmra.mxu0 %v437
        %v517 = vpop.f32.mrf.mxu0
        %v518 = vadd.f32 0.0, %v517
        %v519 = vpop.f32.mrf.mxu0
        %520 = vmatprep.mubr.f32.mxu0 0.0
        %521 = vmatmul.mubr.f32.gmra.mxu0 %v440
        %v522 = vpop.f32.mrf.mxu0
        %v523 = vadd.f32 0.0, %v522
        %v524 = vpop.f32.mrf.mxu0
        %525 = vmatprep.mubr.f32.mxu0 0.0
        %526 = vmatmul.mubr.f32.gmra.mxu0 %v443
        %v527 = vpop.f32.mrf.mxu0
        %v528 = vadd.f32 0.0, %v527
        %v529 = vpop.f32.mrf.mxu0
        %530 = vmatprep.mubr.f32.mxu0 0.0
        %531 = vmatmul.mubr.f32.gmra.mxu0 %v446
        %v532 = vpop.f32.mrf.mxu0
        %v533 = vadd.f32 0.0, %v532
        %v534 = vpop.f32.mrf.mxu0
        %535 = vdwg.mxu0
        %s536 = scalar_lea.vmem %s2, 2
        %v537 = vld [vmem:[%s536] sm:$0x3]
        %v538 = vxor.u32 %v518, 2147483648
        %v539 = vxor.u32 %v523, 2147483648
        %v540 = vxor.u32 %v528, 2147483648
        %v541 = vxor.u32 %v533, 2147483648
        %v542 = vmul.f32 %v538, 1.442695
        %v543 = vpow.pop %v542
        %v544 = vmul.f32 %v539, 1.442695
        %v545 = vpow.pop %v544
        %v546 = vmul.f32 %v540, 1.442695
        %v547 = vpow.pop %v546
        %v548 = vmul.f32 %v541, 1.442695
        %v549 = vpow.pop %v548
        %v550 = vadd.f32 %v543, 1.0
        %v551 = vadd.f32 %v545, 1.0
        %v552 = vadd.f32 %v547, 1.0
        %v553 = vadd.f32 %v549, 1.0
        %v554 = vrcp.pop %v550
        %v555 = vmul.f32 1.0, %v554
        %v556 = vrcp.pop %v551
        %v557 = vmul.f32 1.0, %v556
        %v558 = vrcp.pop %v552
        %v559 = vmul.f32 1.0, %v558
        %v560 = vrcp.pop %v553
        %v561 = vmul.f32 1.0, %v560
        %v563 = vsel %vm350, %v537, 0
        %565 = vmatprep.subr.mxu0 0.0
        %566 = vmatpush1.msra.mxu0 0.0
        %567 = vmatprep.subr.mxu0 0.0
        %568 = vmatpush1.msra.mxu0 0.0
        %569 = vmatprep.subr.mxu0 0.0
        %570 = vmatpush1.msra.mxu0 0.0
        %571 = vmatprep.subr.mxu0 0.0
        %572 = vmatpush1.msra.mxu0 0.0
        %573 = vmatprep.subr.mxu0 0.0
        %574 = vmatpush1.msra.mxu0 0.0
        %575 = vmatprep.subr.mxu0 0.0
        %576 = vmatpush1.msra.mxu0 0.0
        %577 = vmatprep.subr.mxu0 0.0
        %578 = vmatpush1.msra.mxu0 0.0
        %579 = vmatprep.subr.mxu0 0.0
        %580 = vmatpush1.msra.mxu0 0.0
        %581 = vmatprep.subr.mxu0 0.0
        %582 = vmatpush1.msra.mxu0 0.0
        %583 = vmatprep.subr.mxu0 0.0
        %584 = vmatpush1.msra.mxu0 0.0
        %585 = vmatprep.subr.mxu0 0.0
        %586 = vmatpush1.msra.mxu0 0.0
        %587 = vmatprep.subr.mxu0 0.0
        %588 = vmatpush1.msra.mxu0 0.0
        %589 = vmatprep.subr.mxu0 0.0
        %590 = vmatpush1.msra.mxu0 %v561
        %591 = vmatprep.subr.mxu0 0.0
        %592 = vmatpush1.msra.mxu0 %v559
        %593 = vmatprep.subr.mxu0 0.0
        %594 = vmatpush1.msra.mxu0 %v557
        %595 = vmatprep.subr.mxu0 0.0
        %596 = vmatpush1.msra.mxu0 %v555
        %597 = vmatprep.subr.mxu0 0.0
        %598 = vmatpush2.msra.mxu0 0.0
        %599 = vmatprep.subr.mxu0 0.0
        %600 = vmatpush2.msra.mxu0 0.0
        %601 = vmatprep.subr.mxu0 0.0
        %602 = vmatpush2.msra.mxu0 0.0
        %603 = vmatprep.subr.mxu0 0.0
        %604 = vmatpush2.msra.mxu0 0.0
        %605 = vmatprep.subr.mxu0 0.0
        %606 = vmatpush2.msra.mxu0 0.0
        %607 = vmatprep.subr.mxu0 0.0
        %608 = vmatpush2.msra.mxu0 0.0
        %609 = vmatprep.subr.mxu0 0.0
        %610 = vmatpush2.msra.mxu0 0.0
        %611 = vmatprep.subr.mxu0 0.0
        %612 = vmatpush2.msra.mxu0 0.0
        %613 = vmatprep.subr.mxu0 0.0
        %614 = vmatpush2.msra.mxu0 0.0
        %615 = vmatprep.subr.mxu0 0.0
        %616 = vmatpush2.msra.mxu0 0.0
        %617 = vmatprep.subr.mxu0 0.0
        %618 = vmatpush2.msra.mxu0 0.0
        %619 = vmatprep.subr.mxu0 0.0
        %620 = vmatpush2.msra.mxu0 0.0
        %621 = vmatprep.subr.mxu0 0.0
        %622 = vmatpush2.msra.mxu0 0.0
        %623 = vmatprep.subr.mxu0 0.0
        %624 = vmatpush2.msra.mxu0 0.0
        %625 = vmatprep.subr.mxu0 0.0
        %626 = vmatpush2.msra.mxu0 0.0
        %627 = vmatprep.subr.mxu0 0.0
        %628 = vmatpush2.msra.mxu0 0.0
        %629 = vmatprep.mubr.f32.mxu0 0.0
        %630 = vmatmul.mubr.f32.gmra.mxu0 %v563
        %v631 = vpop.f32.mrf.mxu0
        %v632 = vadd.f32 0.0, %v631
        %v633 = vpop.f32.mrf.mxu0
        %634 = vdwg.mxu0
        %v635 = vmul.f32 %v632, %v427
        %v636 = vadd.f32 %v209, %v635
        %v637 = vsel %vm217, %v636, %v215
        %s638 = scalar_lea.vmem %s1, 64
        %v639 = vld [vmem:[%s638] sm:$0xff]
        %v640 = vld [vmem:[%s638 + $0x8] sm:$0xff]
        %v641 = vld [vmem:[%s638 + $0x10] sm:$0xff]
        %v642 = vld [vmem:[%s638 + $0x18] sm:$0xff]
        %v644 = vsel %vm223, %v639, 0
        %v647 = vsel %vm223, %v640, 0
        %v650 = vsel %vm223, %v641, 0
        %v653 = vsel %vm223, %v642, 0
        %v656 = vsel %vm236, %v637, 0
        %658 = vmatprep.subr.mxu0 0.0
        %659 = vmatpush1.msra.mxu0 0.0
        %660 = vmatprep.subr.mxu0 0.0
        %661 = vmatpush1.msra.mxu0 0.0
        %662 = vmatprep.subr.mxu0 0.0
        %663 = vmatpush1.msra.mxu0 0.0
        %664 = vmatprep.subr.mxu0 0.0
        %665 = vmatpush1.msra.mxu0 0.0
        %666 = vmatprep.subr.mxu0 0.0
        %667 = vmatpush1.msra.mxu0 0.0
        %668 = vmatprep.subr.mxu0 0.0
        %669 = vmatpush1.msra.mxu0 0.0
        %670 = vmatprep.subr.mxu0 0.0
        %671 = vmatpush1.msra.mxu0 0.0
        %672 = vmatprep.subr.mxu0 0.0
        %673 = vmatpush1.msra.mxu0 0.0
        %674 = vmatprep.subr.mxu0 0.0
        %675 = vmatpush1.msra.mxu0 0.0
        %676 = vmatprep.subr.mxu0 0.0
        %677 = vmatpush1.msra.mxu0 0.0
        %678 = vmatprep.subr.mxu0 0.0
        %679 = vmatpush1.msra.mxu0 0.0
        %680 = vmatprep.subr.mxu0 0.0
        %681 = vmatpush1.msra.mxu0 0.0
        %682 = vmatprep.subr.mxu0 0.0
        %683 = vmatpush1.msra.mxu0 0.0
        %684 = vmatprep.subr.mxu0 0.0
        %685 = vmatpush1.msra.mxu0 0.0
        %686 = vmatprep.subr.mxu0 0.0
        %687 = vmatpush1.msra.mxu0 0.0
        %688 = vmatprep.subr.mxu0 0.0
        %689 = vmatpush1.msra.mxu0 %v656
        %690 = vmatprep.subr.mxu0 0.0
        %691 = vmatpush2.msra.mxu0 0.0
        %692 = vmatprep.subr.mxu0 0.0
        %693 = vmatpush2.msra.mxu0 0.0
        %694 = vmatprep.subr.mxu0 0.0
        %695 = vmatpush2.msra.mxu0 0.0
        %696 = vmatprep.subr.mxu0 0.0
        %697 = vmatpush2.msra.mxu0 0.0
        %698 = vmatprep.subr.mxu0 0.0
        %699 = vmatpush2.msra.mxu0 0.0
        %700 = vmatprep.subr.mxu0 0.0
        %701 = vmatpush2.msra.mxu0 0.0
        %702 = vmatprep.subr.mxu0 0.0
        %703 = vmatpush2.msra.mxu0 0.0
        %704 = vmatprep.subr.mxu0 0.0
        %705 = vmatpush2.msra.mxu0 0.0
        %706 = vmatprep.subr.mxu0 0.0
        %707 = vmatpush2.msra.mxu0 0.0
        %708 = vmatprep.subr.mxu0 0.0
        %709 = vmatpush2.msra.mxu0 0.0
        %710 = vmatprep.subr.mxu0 0.0
        %711 = vmatpush2.msra.mxu0 0.0
        %712 = vmatprep.subr.mxu0 0.0
        %713 = vmatpush2.msra.mxu0 0.0
        %714 = vmatprep.subr.mxu0 0.0
        %715 = vmatpush2.msra.mxu0 0.0
        %716 = vmatprep.subr.mxu0 0.0
        %717 = vmatpush2.msra.mxu0 0.0
        %718 = vmatprep.subr.mxu0 0.0
        %719 = vmatpush2.msra.mxu0 0.0
        %720 = vmatprep.subr.mxu0 0.0
        %721 = vmatpush2.msra.mxu0 0.0
        %722 = vmatprep.mubr.f32.mxu0 0.0
        %723 = vmatmul.mubr.f32.gmra.mxu0 %v644
        %v724 = vpop.f32.mrf.mxu0
        %v725 = vadd.f32 0.0, %v724
        %v726 = vpop.f32.mrf.mxu0
        %727 = vmatprep.mubr.f32.mxu0 0.0
        %728 = vmatmul.mubr.f32.gmra.mxu0 %v647
        %v729 = vpop.f32.mrf.mxu0
        %v730 = vadd.f32 0.0, %v729
        %v731 = vpop.f32.mrf.mxu0
        %732 = vmatprep.mubr.f32.mxu0 0.0
        %733 = vmatmul.mubr.f32.gmra.mxu0 %v650
        %v734 = vpop.f32.mrf.mxu0
        %v735 = vadd.f32 0.0, %v734
        %v736 = vpop.f32.mrf.mxu0
        %737 = vmatprep.mubr.f32.mxu0 0.0
        %738 = vmatmul.mubr.f32.gmra.mxu0 %v653
        %v739 = vpop.f32.mrf.mxu0
        %v740 = vadd.f32 0.0, %v739
        %v741 = vpop.f32.mrf.mxu0
        %742 = vdwg.mxu0
        %s743 = scalar_lea.vmem %s2, 4
        %v744 = vld [vmem:[%s743] sm:$0x3]
        %v745 = vxor.u32 %v725, 2147483648
        %v746 = vxor.u32 %v730, 2147483648
        %v747 = vxor.u32 %v735, 2147483648
        %v748 = vxor.u32 %v740, 2147483648
        %v749 = vmul.f32 %v745, 1.442695
        %v750 = vpow.pop %v749
        %v751 = vmul.f32 %v746, 1.442695
        %v752 = vpow.pop %v751
        %v753 = vmul.f32 %v747, 1.442695
        %v754 = vpow.pop %v753
        %v755 = vmul.f32 %v748, 1.442695
        %v756 = vpow.pop %v755
        %v757 = vadd.f32 %v750, 1.0
        %v758 = vadd.f32 %v752, 1.0
        %v759 = vadd.f32 %v754, 1.0
        %v760 = vadd.f32 %v756, 1.0
        %v761 = vrcp.pop %v757
        %v762 = vmul.f32 1.0, %v761
        %v763 = vrcp.pop %v758
        %v764 = vmul.f32 1.0, %v763
        %v765 = vrcp.pop %v759
        %v766 = vmul.f32 1.0, %v765
        %v767 = vrcp.pop %v760
        %v768 = vmul.f32 1.0, %v767
        %v770 = vsel %vm350, %v744, 0
        %772 = vmatprep.subr.mxu0 0.0
        %773 = vmatpush1.msra.mxu0 0.0
        %774 = vmatprep.subr.mxu0 0.0
        %775 = vmatpush1.msra.mxu0 0.0
        %776 = vmatprep.subr.mxu0 0.0
        %777 = vmatpush1.msra.mxu0 0.0
        %778 = vmatprep.subr.mxu0 0.0
        %779 = vmatpush1.msra.mxu0 0.0
        %780 = vmatprep.subr.mxu0 0.0
        %781 = vmatpush1.msra.mxu0 0.0
        %782 = vmatprep.subr.mxu0 0.0
        %783 = vmatpush1.msra.mxu0 0.0
        %784 = vmatprep.subr.mxu0 0.0
        %785 = vmatpush1.msra.mxu0 0.0
        %786 = vmatprep.subr.mxu0 0.0
        %787 = vmatpush1.msra.mxu0 0.0
        %788 = vmatprep.subr.mxu0 0.0
        %789 = vmatpush1.msra.mxu0 0.0
        %790 = vmatprep.subr.mxu0 0.0
        %791 = vmatpush1.msra.mxu0 0.0
        %792 = vmatprep.subr.mxu0 0.0
        %793 = vmatpush1.msra.mxu0 0.0
        %794 = vmatprep.subr.mxu0 0.0
        %795 = vmatpush1.msra.mxu0 0.0
        %796 = vmatprep.subr.mxu0 0.0
        %797 = vmatpush1.msra.mxu0 %v768
        %798 = vmatprep.subr.mxu0 0.0
        %799 = vmatpush1.msra.mxu0 %v766
        %800 = vmatprep.subr.mxu0 0.0
        %801 = vmatpush1.msra.mxu0 %v764
        %802 = vmatprep.subr.mxu0 0.0
        %803 = vmatpush1.msra.mxu0 %v762
        %804 = vmatprep.subr.mxu0 0.0
        %805 = vmatpush2.msra.mxu0 0.0
        %806 = vmatprep.subr.mxu0 0.0
        %807 = vmatpush2.msra.mxu0 0.0
        %808 = vmatprep.subr.mxu0 0.0
        %809 = vmatpush2.msra.mxu0 0.0
        %810 = vmatprep.subr.mxu0 0.0
        %811 = vmatpush2.msra.mxu0 0.0
        %812 = vmatprep.subr.mxu0 0.0
        %813 = vmatpush2.msra.mxu0 0.0
        %814 = vmatprep.subr.mxu0 0.0
        %815 = vmatpush2.msra.mxu0 0.0
        %816 = vmatprep.subr.mxu0 0.0
        %817 = vmatpush2.msra.mxu0 0.0
        %818 = vmatprep.subr.mxu0 0.0
        %819 = vmatpush2.msra.mxu0 0.0
        %820 = vmatprep.subr.mxu0 0.0
        %821 = vmatpush2.msra.mxu0 0.0
        %822 = vmatprep.subr.mxu0 0.0
        %823 = vmatpush2.msra.mxu0 0.0
        %824 = vmatprep.subr.mxu0 0.0
        %825 = vmatpush2.msra.mxu0 0.0
        %826 = vmatprep.subr.mxu0 0.0
        %827 = vmatpush2.msra.mxu0 0.0
        %828 = vmatprep.subr.mxu0 0.0
        %829 = vmatpush2.msra.mxu0 0.0
        %830 = vmatprep.subr.mxu0 0.0
        %831 = vmatpush2.msra.mxu0 0.0
        %832 = vmatprep.subr.mxu0 0.0
        %833 = vmatpush2.msra.mxu0 0.0
        %834 = vmatprep.subr.mxu0 0.0
        %835 = vmatpush2.msra.mxu0 0.0
        %836 = vmatprep.mubr.f32.mxu0 0.0
        %837 = vmatmul.mubr.f32.gmra.mxu0 %v770
        %v838 = vpop.f32.mrf.mxu0
        %v839 = vadd.f32 0.0, %v838
        %v840 = vpop.f32.mrf.mxu0
        %841 = vdwg.mxu0
        %v842 = vmul.f32 %v839, %v427
        %v843 = vadd.f32 %v429, %v842
        %v845 = vrot.slane %v636, 6
        %v847 = vsel %vm217, %v843, %v845
        %848 = vst [vmem:[%s207] sm:$0xf] %v847
        %s849 = sand.u32 %s93, 1
        %s850 = scalar_lea.sflag [#allocation4], %s849
        %s851 = sand.u32 %s93, 1
        %s852 = smul.addr %s851, 4
        %s853 = scalar_lea.vmem [#allocation3], %s852
        // Predicated region
        $region71: #{tpu_custom_call.1} parent=65 // pred_check
          %p854 = pneg %p103
        $region72: #{tpu_custom_call.1} parent=65 // pred_check_branch
          %856 = sbr.rel (%p854) target = $region74
        $region73: #{tpu_custom_call.1} parent=65 // pred_region
          %s858 = ssub.s32 64, 64
          %859 = vsyncadd %s850, %s858
          %s860 = smul.addr %s17, 64
          %s861 = scalar_lea.hbm %s3, %s860
          %s863 = sshll.u32 %s853, 4
          %s864 = int_to_ptr.vmem [resolvable:$true] %s863
          %866 = dma.vmem_to_hbm [thread:$0]  %s864, 64, %s861, %s850
        $region74: #{tpu_custom_call.1} parent=65 // pred_fallthru
          _
      $region66: #{tpu_custom_call.1} parent=5 // pred_fallthru
        _
      %p867 = scmp.le.s32.totalorder 2, %s12
      // Predicated region
      $region75: #{tpu_custom_call.1} parent=5 // pred_check
        %p868 = pneg %p867
      $region76: #{tpu_custom_call.1} parent=5 // pred_check_branch
        %870 = sbr.rel (%p868) target = $region78
      $region77: #{tpu_custom_call.1} parent=5 // pred_region
        %s871 = ssub.s32 %s12, 2
        // Predicated region
        $region79: #{tpu_custom_call.1} parent=77 // pred_check
          %p872 = pneg %p109
        $region80: #{tpu_custom_call.1} parent=77 // pred_check_branch
          %874 = sbr.rel (%p872) target = $region82
        $region81: #{tpu_custom_call.1} parent=77 // pred_region
          %s875 = sand.u32 %s94, 1
          %s876 = scalar_lea.sflag [#allocation4], %s875
          %s877 = sand.u32 %s94, 1
          %s878 = smul.addr %s877, 4
          %s879 = scalar_lea.vmem [#allocation3], %s878
          %880 = dma.done %s876, 64
        $region82: #{tpu_custom_call.1} parent=77 // pred_fallthru
          _
      $region78: #{tpu_custom_call.1} parent=5 // pred_fallthru
        _
    $region6: #{tpu_custom_call.1} parent=1 // loop_footer
      %s16 = sadd.s32 1, %s12
    $region7: #{tpu_custom_call.1} parent=1 // loop_footer_branch
      %11 = sbr.rel target = $region3
    $region8: #{tpu_custom_call.1} parent=1 // loop_exit
      _
    %881 = vsyncpa [#allocation4], 1
    %s882 = scalar_lea.sflag [#allocation4], 1
    %883 = vsyncpa %s882, 1

</llo_original>
